<compile_context>
chip_gen: v7x
topology: tpu7x:2x2x1
jax: 0.10.0
libtpu: 0.0.40
codegen_flags: <defaults>
</compile_context>

<pallas_src>
import functools

import jax
import jax.numpy as jnp
from jax.experimental import pallas as pl
from jax.experimental.pallas import tpu as pltpu

LANE = 128       # lane (output) width of every padded weight layer
DIN_PAD = 32     # trimmed/padded contraction dim: fits N + Na + 1 and HIDDEN + 1
SUBLANE = 8      # action rows in the X tile (Na <= 8)
HIDDEN = 16      # hidden width of the Q network (nn.Linear(*, 16))


def policy_kernel(ctrl_ref, s_ref, w_ref, out_ref, *, N, Na, hidden):
    """out_ref[0] = eps-greedy action; Q(s, a) for all a computed in one pass."""
    row = jax.lax.broadcasted_iota(jnp.int32, (SUBLANE, DIN_PAD), 0)
    col = jax.lax.broadcasted_iota(jnp.int32, (SUBLANE, DIN_PAD), 1)

    # Row j of X = [s, one_hot(j), 1.0 (bias lane), 0...]; s_ref already holds
    # state + layer-1 bias lane, the per-action one-hot is built in-register.
    one_hot = jnp.logical_and(col == N + row, row < Na).astype(jnp.float32)
    x = jnp.broadcast_to(s_ref[...], (SUBLANE, DIN_PAD)) + one_hot

    row_o = jax.lax.broadcasted_iota(jnp.int32, (SUBLANE, LANE), 0)
    col_o = jax.lax.broadcasted_iota(jnp.int32, (SUBLANE, LANE), 1)
    bias_lane = (col_o == hidden).astype(jnp.float32)   # feeds next layer's bias row

    # 4 x (linear + ReLU) + final linear.  Bias of each layer is folded into
    # row `din` of its padded weight block; bf16 only at the MXU inputs.
    h = x                                                     # (8, DIN_PAD) f32
    for layer in range(4):
        h = jnp.dot(h[:, :DIN_PAD].astype(jnp.bfloat16), w_ref[layer],
                    preferred_element_type=jnp.float32)       # (8, LANE)
        h = jnp.maximum(h, 0.0) + bias_lane                   # ReLU + bias lane (f32)
    q = jnp.dot(h[:, :DIN_PAD].astype(jnp.bfloat16), w_ref[4],
                preferred_element_type=jnp.float32)           # column 0 = Q(s, row)

    # Greedy argmax over the Na valid rows (first-max tie-break, like np.argmax).
    valid = jnp.logical_and(row_o < Na, col_o == 0)
    qm = jnp.where(valid, q, -jnp.inf)
    hit = jnp.logical_and(valid, qm == jnp.max(qm))
    greedy = jnp.min(jnp.where(hit, row_o, Na))               # int32, lowest hit row

    # Epsilon-greedy select using the pre-drawn SMEM scalars.
    explore = ctrl_ref[0]
    rand_act = ctrl_ref[1]
    out_ref[0] = jnp.where(explore != 0, rand_act, greedy).astype(jnp.int32)


def make_q_params(key, N, Na, hidden=HIDDEN):
    """Deterministic synthetic init matching the nn.Linear shapes (weights transposed)."""
    dims = [(N + Na, hidden), (hidden, hidden), (hidden, hidden),
            (hidden, hidden), (hidden, 1)]
    params = []
    for i, (din, dout) in enumerate(dims):
        kw, kb = jax.random.split(jax.random.fold_in(key, i))
        bound = 1.0 / (din ** 0.5)
        w = jax.random.uniform(kw, (din, dout), jnp.float32, -bound, bound)
        b = jax.random.uniform(kb, (dout,), jnp.float32, -bound, bound)
        params.append((w, b))
    return params


def fuse_q_params(params):
    """Fold biases into one trimmed, pre-padded [5, DIN_PAD, LANE] bf16 slab (built once)."""
    slab = jnp.zeros((len(params), DIN_PAD, LANE), jnp.float32)
    for i, (w, b) in enumerate(params):
        din, dout = w.shape
        assert din + 1 <= DIN_PAD and dout <= LANE
        slab = slab.at[i, :din, :dout].set(w)
        slab = slab.at[i, din, :dout].set(b)     # bias lives in augmented row `din`
    return slab.astype(jnp.bfloat16)


@functools.partial(jax.jit, static_argnames=("N", "Na", "hidden"))
def policy_forward(s, slab, key, epsilon, *, N, Na, hidden=HIDDEN):
    """Epsilon-greedy action for state s: one fused Pallas call, int32 scalar out."""
    # TODO(synk): jax.random stream differs bit-for-bit from np.random.binomial /
    # torch.randint in the original module (same distribution, different bits).
    k_bern, k_act = jax.random.split(key)
    explore = (jax.random.uniform(k_bern, (), jnp.float32) < epsilon).astype(jnp.int32)
    rand_act = jax.random.randint(k_act, (), 0, Na, dtype=jnp.int32)
    ctrl = jnp.stack([explore, rand_act])

    # State padded to the trimmed contraction width, layer-1 bias lane folded in.
    s_pad = (jnp.zeros((1, DIN_PAD), jnp.float32)
             .at[0, :N].set(s.astype(jnp.float32))
             .at[0, N + Na].set(1.0))

    kernel = functools.partial(policy_kernel, N=N, Na=Na, hidden=hidden)
    action = pl.pallas_call(
        kernel,
        out_shape=jax.ShapeDtypeStruct((1,), jnp.int32),
        in_specs=[
            pl.BlockSpec(memory_space=pltpu.SMEM),   # (2,) [Bernoulli(eps) flag, random action]
            pl.BlockSpec(memory_space=pltpu.VMEM),   # padded state (1, DIN_PAD)
            pl.BlockSpec(memory_space=pltpu.VMEM),   # fused bf16 weight slab (5, DIN_PAD, LANE)
        ],
        out_specs=pl.BlockSpec(memory_space=pltpu.SMEM),
    )(ctrl, s_pad, slab)
    return action[0]


def q_values_ref(s, params, Na):
    """Pure-JAX reference of Q.forward for every action, mirroring the kernel's
    bf16-weight / f32-accumulate arithmetic."""
    rnd = lambda v: v.astype(jnp.bfloat16).astype(jnp.float32)
    eye = jnp.eye(Na, dtype=jnp.float32)

    def single(a_onehot):
        h = jnp.concatenate([s.astype(jnp.float32), a_onehot])
        for (w, b) in params[:-1]:
            h = jnp.maximum(rnd(h) @ rnd(w) + rnd(b), 0.0)
        w, b = params[-1]
        return (rnd(h) @ rnd(w) + rnd(b))[0]

    return jax.vmap(single)(eye)


if __name__ == "__main__":
    N = 4        # observation dim
    Na = 4       # number of actions
    assert Na <= SUBLANE and N + Na + 1 <= DIN_PAD and HIDDEN + 1 <= DIN_PAD

    key = jax.random.PRNGKey(0)
    k_params, k_state, k_pol = jax.random.split(key, 3)

    params = make_q_params(k_params, N, Na)
    slab = fuse_q_params(params)                 # built once, reused every call
    s = jax.random.normal(k_state, (N,), jnp.float32)

    # Correctness: with epsilon=0 the kernel must return the greedy argmax.
    greedy_ref = int(jnp.argmax(q_values_ref(s, params, Na)))
    a0 = policy_forward(s, slab, k_pol, jnp.float32(0.0), N=N, Na=Na)
    a0 = int(jax.block_until_ready(a0))
    assert a0 == greedy_ref, (a0, greedy_ref)

    # Epsilon-greedy decisions; annealing epsilon reuses the same compiled
    # artifact because epsilon is a traced scalar, not a baked-in constant.
    for eps in (0.1, 0.05):
        k_pol, k_step = jax.random.split(k_pol)
        a = int(jax.block_until_ready(
            policy_forward(s, slab, k_step, jnp.float32(eps), N=N, Na=Na)))
        assert 0 <= a < Na

    print("KERNEL_OK")
</pallas_src>

<mosaic_0001>
module attributes {stable_mosaic.version = 11 : i64} {
  func.func @policy_kernel(%arg0: memref<2xi32, #tpu.memory_space<smem>>, %arg1: memref<1x32xf32, #tpu.memory_space<vmem>>, %arg2: memref<5x32x128xbf16, #tpu.memory_space<vmem>>, %arg3: memref<1xi32, #tpu.memory_space<smem>>) attributes {dimension_semantics = [], scalar_prefetch = 0 : i64, scratch_operands = 0 : i64, tpu.core_type = #tpu.core_type<tc>} {
    %0 = tpu.iota {dimensions = array<i32: 0>} : vector<8x32xi32>
    %1 = tpu.iota {dimensions = array<i32: 1>} : vector<8x32xi32>
    %c4_i32 = arith.constant 4 : i32
    %2 = vector.broadcast %c4_i32 : i32 to vector<8x32xi32>
    %3 = arith.addi %2, %0 : vector<8x32xi32>
    %4 = arith.cmpi eq, %1, %3 : vector<8x32xi32>
    %c4_i32_0 = arith.constant 4 : i32
    %5 = vector.broadcast %c4_i32_0 : i32 to vector<8x32xi32>
    %6 = arith.cmpi slt, %0, %5 : vector<8x32xi32>
    %7 = arith.andi %4, %6 : vector<8x32xi1>
    %8 = arith.extui %7 : vector<8x32xi1> to vector<8x32xi32>
    %9 = arith.sitofp %8 : vector<8x32xi32> to vector<8x32xf32>
    %c0 = arith.constant 0 : index
    %c0_1 = arith.constant 0 : index
    %10 = vector.load %arg1[%c0, %c0_1] : memref<1x32xf32, #tpu.memory_space<vmem>>, vector<1x32xf32>
    %11 = vector.shape_cast %10 : vector<1x32xf32> to vector<1x32xf32>
    %12 = vector.broadcast %11 : vector<1x32xf32> to vector<8x32xf32>
    %13 = arith.addf %12, %9 : vector<8x32xf32>
    %14 = tpu.iota {dimensions = array<i32: 0>} : vector<8x128xi32>
    %15 = tpu.iota {dimensions = array<i32: 1>} : vector<8x128xi32>
    %c16_i32 = arith.constant 16 : i32
    %16 = vector.broadcast %c16_i32 : i32 to vector<8x128xi32>
    %17 = arith.cmpi eq, %15, %16 : vector<8x128xi32>
    %18 = arith.extui %17 : vector<8x128xi1> to vector<8x128xi32>
    %19 = arith.sitofp %18 : vector<8x128xi32> to vector<8x128xf32>
    %20 = arith.truncf %13 : vector<8x32xf32> to vector<8x32xbf16>
    %c0_2 = arith.constant 0 : index
    %c0_3 = arith.constant 0 : index
    %c0_4 = arith.constant 0 : index
    %21 = vector.load %arg2[%c0_2, %c0_3, %c0_4] : memref<5x32x128xbf16, #tpu.memory_space<vmem>>, vector<1x32x128xbf16>
    %22 = vector.shape_cast %21 : vector<1x32x128xbf16> to vector<32x128xbf16>
    %cst = arith.constant dense<0.000000e+00> : vector<8x128xf32>
    %23 = tpu.matmul %20, %22, %cst {dimension_numbers = #tpu.dot_dimension_numbers<[1], [0], [0], [1], [0, 0, 1, 1], [], []>} : vector<8x32xbf16>, vector<32x128xbf16>, vector<8x128xf32> -> vector<8x128xf32>
    %cst_5 = arith.constant 0.000000e+00 : f32
    %24 = vector.broadcast %cst_5 : f32 to vector<8x128xf32>
    %25 = arith.maximumf %23, %24 : vector<8x128xf32>
    %26 = arith.addf %25, %19 : vector<8x128xf32>
    %27 = vector.extract_strided_slice %26 {offsets = [0, 0], sizes = [8, 32], strides = [1, 1]} : vector<8x128xf32> to vector<8x32xf32>
    %28 = arith.truncf %27 : vector<8x32xf32> to vector<8x32xbf16>
    %c1 = arith.constant 1 : index
    %c0_6 = arith.constant 0 : index
    %c0_7 = arith.constant 0 : index
    %29 = vector.load %arg2[%c1, %c0_6, %c0_7] : memref<5x32x128xbf16, #tpu.memory_space<vmem>>, vector<1x32x128xbf16>
    %30 = vector.shape_cast %29 : vector<1x32x128xbf16> to vector<32x128xbf16>
    %cst_8 = arith.constant dense<0.000000e+00> : vector<8x128xf32>
    %31 = tpu.matmul %28, %30, %cst_8 {dimension_numbers = #tpu.dot_dimension_numbers<[1], [0], [0], [1], [0, 0, 1, 1], [], []>} : vector<8x32xbf16>, vector<32x128xbf16>, vector<8x128xf32> -> vector<8x128xf32>
    %cst_9 = arith.constant 0.000000e+00 : f32
    %32 = vector.broadcast %cst_9 : f32 to vector<8x128xf32>
    %33 = arith.maximumf %31, %32 : vector<8x128xf32>
    %34 = arith.addf %33, %19 : vector<8x128xf32>
    %35 = vector.extract_strided_slice %34 {offsets = [0, 0], sizes = [8, 32], strides = [1, 1]} : vector<8x128xf32> to vector<8x32xf32>
    %36 = arith.truncf %35 : vector<8x32xf32> to vector<8x32xbf16>
    %c2 = arith.constant 2 : index
    %c0_10 = arith.constant 0 : index
    %c0_11 = arith.constant 0 : index
    %37 = vector.load %arg2[%c2, %c0_10, %c0_11] : memref<5x32x128xbf16, #tpu.memory_space<vmem>>, vector<1x32x128xbf16>
    %38 = vector.shape_cast %37 : vector<1x32x128xbf16> to vector<32x128xbf16>
    %cst_12 = arith.constant dense<0.000000e+00> : vector<8x128xf32>
    %39 = tpu.matmul %36, %38, %cst_12 {dimension_numbers = #tpu.dot_dimension_numbers<[1], [0], [0], [1], [0, 0, 1, 1], [], []>} : vector<8x32xbf16>, vector<32x128xbf16>, vector<8x128xf32> -> vector<8x128xf32>
    %cst_13 = arith.constant 0.000000e+00 : f32
    %40 = vector.broadcast %cst_13 : f32 to vector<8x128xf32>
    %41 = arith.maximumf %39, %40 : vector<8x128xf32>
    %42 = arith.addf %41, %19 : vector<8x128xf32>
    %43 = vector.extract_strided_slice %42 {offsets = [0, 0], sizes = [8, 32], strides = [1, 1]} : vector<8x128xf32> to vector<8x32xf32>
    %44 = arith.truncf %43 : vector<8x32xf32> to vector<8x32xbf16>
    %c3 = arith.constant 3 : index
    %c0_14 = arith.constant 0 : index
    %c0_15 = arith.constant 0 : index
    %45 = vector.load %arg2[%c3, %c0_14, %c0_15] : memref<5x32x128xbf16, #tpu.memory_space<vmem>>, vector<1x32x128xbf16>
    %46 = vector.shape_cast %45 : vector<1x32x128xbf16> to vector<32x128xbf16>
    %cst_16 = arith.constant dense<0.000000e+00> : vector<8x128xf32>
    %47 = tpu.matmul %44, %46, %cst_16 {dimension_numbers = #tpu.dot_dimension_numbers<[1], [0], [0], [1], [0, 0, 1, 1], [], []>} : vector<8x32xbf16>, vector<32x128xbf16>, vector<8x128xf32> -> vector<8x128xf32>
    %cst_17 = arith.constant 0.000000e+00 : f32
    %48 = vector.broadcast %cst_17 : f32 to vector<8x128xf32>
    %49 = arith.maximumf %47, %48 : vector<8x128xf32>
    %50 = arith.addf %49, %19 : vector<8x128xf32>
    %51 = vector.extract_strided_slice %50 {offsets = [0, 0], sizes = [8, 32], strides = [1, 1]} : vector<8x128xf32> to vector<8x32xf32>
    %52 = arith.truncf %51 : vector<8x32xf32> to vector<8x32xbf16>
    %c4 = arith.constant 4 : index
    %c0_18 = arith.constant 0 : index
    %c0_19 = arith.constant 0 : index
    %53 = vector.load %arg2[%c4, %c0_18, %c0_19] : memref<5x32x128xbf16, #tpu.memory_space<vmem>>, vector<1x32x128xbf16>
    %54 = vector.shape_cast %53 : vector<1x32x128xbf16> to vector<32x128xbf16>
    %cst_20 = arith.constant dense<0.000000e+00> : vector<8x128xf32>
    %55 = tpu.matmul %52, %54, %cst_20 {dimension_numbers = #tpu.dot_dimension_numbers<[1], [0], [0], [1], [0, 0, 1, 1], [], []>} : vector<8x32xbf16>, vector<32x128xbf16>, vector<8x128xf32> -> vector<8x128xf32>
    %c4_i32_21 = arith.constant 4 : i32
    %56 = vector.broadcast %c4_i32_21 : i32 to vector<8x128xi32>
    %57 = arith.cmpi slt, %14, %56 : vector<8x128xi32>
    %c0_i32 = arith.constant 0 : i32
    %58 = vector.broadcast %c0_i32 : i32 to vector<8x128xi32>
    %59 = arith.cmpi eq, %15, %58 : vector<8x128xi32>
    %60 = arith.andi %57, %59 : vector<8x128xi1>
    %cst_22 = arith.constant 0xFF800000 : f32
    %61 = vector.broadcast %cst_22 : f32 to vector<8x128xf32>
    %62 = arith.select %60, %55, %61 : vector<8x128xi1>, vector<8x128xf32>
    %63 = vector.shape_cast %62 : vector<8x128xf32> to vector<1x8x128xf32>
    %cst_23 = arith.constant dense<0xFF800000> : vector<1xf32>
    %64 = vector.multi_reduction <maximumf>, %63, %cst_23 [1, 2] : vector<1x8x128xf32> to vector<1xf32>
    %65 = vector.shape_cast %64 : vector<1xf32> to vector<1x1x1xf32>
    %66 = vector.extract %65[0, 0, 0] : f32 from vector<1x1x1xf32>
    %67 = vector.broadcast %66 : f32 to vector<8x128xf32>
    %68 = arith.cmpf oeq, %62, %67 : vector<8x128xf32>
    %69 = arith.andi %60, %68 : vector<8x128xi1>
    %c4_i32_24 = arith.constant 4 : i32
    %70 = vector.broadcast %c4_i32_24 : i32 to vector<8x128xi32>
    %71 = arith.select %69, %14, %70 : vector<8x128xi1>, vector<8x128xi32>
    %72 = vector.shape_cast %71 : vector<8x128xi32> to vector<1x8x128xi32>
    %cst_25 = arith.constant dense<2147483647> : vector<1xi32>
    %73 = vector.multi_reduction <minsi>, %72, %cst_25 [1, 2] : vector<1x8x128xi32> to vector<1xi32>
    %74 = vector.shape_cast %73 : vector<1xi32> to vector<1x1x1xi32>
    %75 = vector.extract %74[0, 0, 0] : i32 from vector<1x1x1xi32>
    %c0_26 = arith.constant 0 : index
    %76 = memref.load %arg0[%c0_26] : memref<2xi32, #tpu.memory_space<smem>>
    %c1_27 = arith.constant 1 : index
    %77 = memref.load %arg0[%c1_27] : memref<2xi32, #tpu.memory_space<smem>>
    %c0_i32_28 = arith.constant 0 : i32
    %78 = arith.cmpi ne, %76, %c0_i32_28 : i32
    %79 = arith.select %78, %77, %75 : i32
    %c0_29 = arith.constant 0 : index
    %80 = memref.load %arg3[%c0_29] : memref<1xi32, #tpu.memory_space<smem>>
    memref.store %79, %arg3[%c0_29] : memref<1xi32, #tpu.memory_space<smem>>
    return
  }
}

</mosaic_0001>

<llo_original>
// kernel: policy_forward.1
$region0: #{policy_forward.1}
  #allocation0 [shape = 'u32[]', space=smem, size = 0x4, offset = 0x4, fixed_abs, tag = 'smem constant byte address 0x4 - core index']
  #allocation1 [shape = 'u32[144,128]{1,0:T(1,128)}', space=vmem, size = 0x12000, scoped, tag = 'internal scratch']
  %s0 = inlined_call_operand.vmem [shape: s32[2], index: 0, kind: input, shape index: {}]
  %s1 = inlined_call_operand.vmem [shape: f32[1,32], index: 1, kind: input, shape index: {}]
  %s2 = inlined_call_operand.vmem [shape: bf16[5,32,128], index: 2, kind: input, shape index: {}]
  %s3 = inlined_call_operand.hbm [shape: s32[1], index: 3, kind: output, shape index: {}]
  %s4 = sld [smem:[#allocation0]]
  $region26: #{policy_forward.1} parent=0
    _
  %s6 = ssub.s32 1, %s4
  %s7 = scalar_select 0, %s6, %s4
  $region1: #{policy_forward.1} parent=0
    #allocation2 [shape = 'u8[512]{0}', space=smem, size = 0x200, scoped, tag = 'input window, operand 0, single buffered']
    #allocation3 [shape = 's32[1]{0}', space=sflag, size = 0x4, scoped, tag = 'scoped memory for policy_forward.1']
    #allocation4 [shape = 's32[1]{0}', space=sflag, size = 0x4, scoped, tag = 'scoped memory for policy_forward.1']
    #allocation5 [shape = 'u8[512]{0}', space=smem, size = 0x200, scoped, tag = 'output window, operand 0, single buffered']
    %8 = vsyncpa [#allocation4], 0
    %9 = vsyncpa [#allocation3], 0
    // Predicated region
    $region2: #{policy_forward.1} parent=1 // pred_check
      _
    $region3: #{policy_forward.1} parent=1 // pred_check_branch
      %11 = sbr.rel (0) target = $region5
    $region4: #{policy_forward.1} parent=1 // pred_region
      %s13 = ssub.s32 16, 16
      %14 = vsyncadd [#allocation4], %s13
      %s16 = sshll.u32 %s0, 4
      %s17 = int_to_ptr.vmem [resolvable:$true] %s16
      %19 = dma.vmem_to_smem %s17, 16, [#allocation2], [#allocation4]
    $region5: #{policy_forward.1} parent=1 // pred_fallthru
      _
    // Predicated region
    $region6: #{policy_forward.1} parent=1 // pred_check
      _
    $region7: #{policy_forward.1} parent=1 // pred_check_branch
      %21 = sbr.rel (0) target = $region9
    $region8: #{policy_forward.1} parent=1 // pred_region
      _
    $region9: #{policy_forward.1} parent=1 // pred_fallthru
      _
    // Predicated region
    $region10: #{policy_forward.1} parent=1 // pred_check
      _
    $region11: #{policy_forward.1} parent=1 // pred_check_branch
      %23 = sbr.rel (0) target = $region13
    $region12: #{policy_forward.1} parent=1 // pred_region
      _
    $region13: #{policy_forward.1} parent=1 // pred_fallthru
      _
    // Predicated region
    $region14: #{policy_forward.1} parent=1 // pred_check
      _
    $region15: #{policy_forward.1} parent=1 // pred_check_branch
      %25 = sbr.rel (0) target = $region17
    $region16: #{policy_forward.1} parent=1 // pred_region
      %26 = dma.done [#allocation4], 16
    $region17: #{policy_forward.1} parent=1 // pred_fallthru
      _
    %27 = sfence
    %v29 = vlaneseq
    %v30 = vshrl.u32 %v29, 7
    %v31 = vlaneseq
    %v32 = vand.u32 %v31, 127
    %v33 = vadd.s32 %v30, 4
    %vm34 = vcmp.eq.s32.totalorder %v32, %v33
    %vm35 = vcmp.lt.s32.totalorder %v30, 4
    %vm36 = vmand %vm34, %vm35
    %v37 = vsel %vm36, 1, 0
    %v38 = vcvt.s32.f32 %v37
    %v39 = vld [vmem:[%s1] sm:$0x1]
    %v41 = vlaneseq
    %v42 = vshrl.u32 %v41, 7
    %v43 = vsub.s32 0, %v42
    %v44 = vrot.slane %v39, %v43
    %v46 = vadd.f32 %v44, %v38
    %vm47 = vcmp.eq.s32.totalorder %v32, 16
    %v48 = vsel %vm47, 1, 0
    %v49 = vcvt.s32.f32 %v48
    %v50 = vpack.c.bf16 %v46, %v46
    %v51 = vld [vmem:[%s2] sm:$0xf]
    %v52 = vld [vmem:[%s2 + $0x4] sm:$0xf]
    %v53 = vld [vmem:[%s2 + $0x8] sm:$0xf]
    %v54 = vld [vmem:[%s2 + $0xc] sm:$0xf]
    %v59 = vunpack.c.l.b16 %v51
    %v60 = vunpack.c.l.b16 %v52
    %v61 = vunpack.c.l.b16 %v53
    %v62 = vunpack.c.l.b16 %v54
    %v63 = vpack.c.b16 %v60, %v59
    %v64 = vpack.c.b16 %v62, %v61
    %vm67 = vcmask 261120
    %v69 = vsel %vm67, %v50, 0
    %71 = vmatprep.subr.bf16.mxu0 0
    %72 = vmatpush1.bf16.msra.mxu0 %v63
    %73 = vmatprep.subr.bf16.mxu0 0
    %74 = vmatpush1.bf16.msra.mxu0 %v64
    %75 = vmatprep.subr.bf16.mxu0 0
    %76 = vmatpush1.bf16.msra.mxu0 0
    %77 = vmatprep.subr.bf16.mxu0 0
    %78 = vmatpush1.bf16.msra.mxu0 0
    %79 = vmatprep.subr.bf16.mxu0 0
    %80 = vmatpush1.bf16.msra.mxu0 0
    %81 = vmatprep.subr.bf16.mxu0 0
    %82 = vmatpush1.bf16.msra.mxu0 0
    %83 = vmatprep.subr.bf16.mxu0 0
    %84 = vmatpush1.bf16.msra.mxu0 0
    %85 = vmatprep.subr.bf16.mxu0 0
    %86 = vmatpush1.bf16.msra.mxu0 0
    %87 = vmatprep.subr.bf16.mxu0 0
    %88 = vmatpush1.bf16.msra.mxu0 0
    %89 = vmatprep.subr.bf16.mxu0 0
    %90 = vmatpush1.bf16.msra.mxu0 0
    %91 = vmatprep.subr.bf16.mxu0 0
    %92 = vmatpush1.bf16.msra.mxu0 0
    %93 = vmatprep.subr.bf16.mxu0 0
    %94 = vmatpush1.bf16.msra.mxu0 0
    %95 = vmatprep.subr.bf16.mxu0 0
    %96 = vmatpush1.bf16.msra.mxu0 0
    %97 = vmatprep.subr.bf16.mxu0 0
    %98 = vmatpush1.bf16.msra.mxu0 0
    %99 = vmatprep.subr.bf16.mxu0 0
    %100 = vmatpush1.bf16.msra.mxu0 0
    %101 = vmatprep.subr.bf16.mxu0 0
    %102 = vmatpush1.bf16.msra.mxu0 0
    %103 = vmatprep.mubr.bf16.mxu0 0
    %104 = vmatmul.mubr.bf16.gmra.mrb[0].mxu0 %v69
    %v105 = vpop.f32.mrb[0].mxu0
    %v106 = vadd.f32 0.0, %v105
    %v107 = vpop.f32.mrb[0].mxu0
    %v108 = vpop.f32.mrb[0].mxu0
    %v109 = vpop.f32.mrb[0].mxu0
    %110 = vdwg.mxu0
    %v111 = vmax.f32 %v106, 0.0
    %v112 = vadd.f32 %v111, %v49
    %v113 = vpack.c.bf16 %v112, %v112
    %s114 = scalar_lea.vmem %s2, 16
    %v115 = vld [vmem:[%s114] sm:$0xf]
    %v116 = vld [vmem:[%s114 + $0x4] sm:$0xf]
    %v117 = vld [vmem:[%s114 + $0x8] sm:$0xf]
    %v118 = vld [vmem:[%s114 + $0xc] sm:$0xf]
    %v123 = vunpack.c.l.b16 %v115
    %v124 = vunpack.c.l.b16 %v116
    %v125 = vunpack.c.l.b16 %v117
    %v126 = vunpack.c.l.b16 %v118
    %v127 = vpack.c.b16 %v124, %v123
    %v128 = vpack.c.b16 %v126, %v125
    %v132 = vsel %vm67, %v113, 0
    %134 = vmatprep.subr.bf16.mxu0 0
    %135 = vmatpush1.bf16.msra.mxu0 %v127
    %136 = vmatprep.subr.bf16.mxu0 0
    %137 = vmatpush1.bf16.msra.mxu0 %v128
    %138 = vmatprep.subr.bf16.mxu0 0
    %139 = vmatpush1.bf16.msra.mxu0 0
    %140 = vmatprep.subr.bf16.mxu0 0
    %141 = vmatpush1.bf16.msra.mxu0 0
    %142 = vmatprep.subr.bf16.mxu0 0
    %143 = vmatpush1.bf16.msra.mxu0 0
    %144 = vmatprep.subr.bf16.mxu0 0
    %145 = vmatpush1.bf16.msra.mxu0 0
    %146 = vmatprep.subr.bf16.mxu0 0
    %147 = vmatpush1.bf16.msra.mxu0 0
    %148 = vmatprep.subr.bf16.mxu0 0
    %149 = vmatpush1.bf16.msra.mxu0 0
    %150 = vmatprep.subr.bf16.mxu0 0
    %151 = vmatpush1.bf16.msra.mxu0 0
    %152 = vmatprep.subr.bf16.mxu0 0
    %153 = vmatpush1.bf16.msra.mxu0 0
    %154 = vmatprep.subr.bf16.mxu0 0
    %155 = vmatpush1.bf16.msra.mxu0 0
    %156 = vmatprep.subr.bf16.mxu0 0
    %157 = vmatpush1.bf16.msra.mxu0 0
    %158 = vmatprep.subr.bf16.mxu0 0
    %159 = vmatpush1.bf16.msra.mxu0 0
    %160 = vmatprep.subr.bf16.mxu0 0
    %161 = vmatpush1.bf16.msra.mxu0 0
    %162 = vmatprep.subr.bf16.mxu0 0
    %163 = vmatpush1.bf16.msra.mxu0 0
    %164 = vmatprep.subr.bf16.mxu0 0
    %165 = vmatpush1.bf16.msra.mxu0 0
    %166 = vmatprep.mubr.bf16.mxu0 0
    %167 = vmatmul.mubr.bf16.gmra.mrb[0].mxu0 %v132
    %v168 = vpop.f32.mrb[0].mxu0
    %v169 = vadd.f32 0.0, %v168
    %v170 = vpop.f32.mrb[0].mxu0
    %v171 = vpop.f32.mrb[0].mxu0
    %v172 = vpop.f32.mrb[0].mxu0
    %173 = vdwg.mxu0
    %v174 = vmax.f32 %v169, 0.0
    %v175 = vadd.f32 %v174, %v49
    %v176 = vpack.c.bf16 %v175, %v175
    %s177 = scalar_lea.vmem %s2, 32
    %v178 = vld [vmem:[%s177] sm:$0xf]
    %v179 = vld [vmem:[%s177 + $0x4] sm:$0xf]
    %v180 = vld [vmem:[%s177 + $0x8] sm:$0xf]
    %v181 = vld [vmem:[%s177 + $0xc] sm:$0xf]
    %v186 = vunpack.c.l.b16 %v178
    %v187 = vunpack.c.l.b16 %v179
    %v188 = vunpack.c.l.b16 %v180
    %v189 = vunpack.c.l.b16 %v181
    %v190 = vpack.c.b16 %v187, %v186
    %v191 = vpack.c.b16 %v189, %v188
    %v195 = vsel %vm67, %v176, 0
    %197 = vmatprep.subr.bf16.mxu0 0
    %198 = vmatpush1.bf16.msra.mxu0 %v190
    %199 = vmatprep.subr.bf16.mxu0 0
    %200 = vmatpush1.bf16.msra.mxu0 %v191
    %201 = vmatprep.subr.bf16.mxu0 0
    %202 = vmatpush1.bf16.msra.mxu0 0
    %203 = vmatprep.subr.bf16.mxu0 0
    %204 = vmatpush1.bf16.msra.mxu0 0
    %205 = vmatprep.subr.bf16.mxu0 0
    %206 = vmatpush1.bf16.msra.mxu0 0
    %207 = vmatprep.subr.bf16.mxu0 0
    %208 = vmatpush1.bf16.msra.mxu0 0
    %209 = vmatprep.subr.bf16.mxu0 0
    %210 = vmatpush1.bf16.msra.mxu0 0
    %211 = vmatprep.subr.bf16.mxu0 0
    %212 = vmatpush1.bf16.msra.mxu0 0
    %213 = vmatprep.subr.bf16.mxu0 0
    %214 = vmatpush1.bf16.msra.mxu0 0
    %215 = vmatprep.subr.bf16.mxu0 0
    %216 = vmatpush1.bf16.msra.mxu0 0
    %217 = vmatprep.subr.bf16.mxu0 0
    %218 = vmatpush1.bf16.msra.mxu0 0
    %219 = vmatprep.subr.bf16.mxu0 0
    %220 = vmatpush1.bf16.msra.mxu0 0
    %221 = vmatprep.subr.bf16.mxu0 0
    %222 = vmatpush1.bf16.msra.mxu0 0
    %223 = vmatprep.subr.bf16.mxu0 0
    %224 = vmatpush1.bf16.msra.mxu0 0
    %225 = vmatprep.subr.bf16.mxu0 0
    %226 = vmatpush1.bf16.msra.mxu0 0
    %227 = vmatprep.subr.bf16.mxu0 0
    %228 = vmatpush1.bf16.msra.mxu0 0
    %229 = vmatprep.mubr.bf16.mxu0 0
    %230 = vmatmul.mubr.bf16.gmra.mrb[0].mxu0 %v195
    %v231 = vpop.f32.mrb[0].mxu0
    %v232 = vadd.f32 0.0, %v231
    %v233 = vpop.f32.mrb[0].mxu0
    %v234 = vpop.f32.mrb[0].mxu0
    %v235 = vpop.f32.mrb[0].mxu0
    %236 = vdwg.mxu0
    %v237 = vmax.f32 %v232, 0.0
    %v238 = vadd.f32 %v237, %v49
    %v239 = vpack.c.bf16 %v238, %v238
    %s240 = scalar_lea.vmem %s2, 48
    %v241 = vld [vmem:[%s240] sm:$0xf]
    %v242 = vld [vmem:[%s240 + $0x4] sm:$0xf]
    %v243 = vld [vmem:[%s240 + $0x8] sm:$0xf]
    %v244 = vld [vmem:[%s240 + $0xc] sm:$0xf]
    %v249 = vunpack.c.l.b16 %v241
    %v250 = vunpack.c.l.b16 %v242
    %v251 = vunpack.c.l.b16 %v243
    %v252 = vunpack.c.l.b16 %v244
    %v253 = vpack.c.b16 %v250, %v249
    %v254 = vpack.c.b16 %v252, %v251
    %v258 = vsel %vm67, %v239, 0
    %260 = vmatprep.subr.bf16.mxu0 0
    %261 = vmatpush1.bf16.msra.mxu0 %v253
    %262 = vmatprep.subr.bf16.mxu0 0
    %263 = vmatpush1.bf16.msra.mxu0 %v254
    %264 = vmatprep.subr.bf16.mxu0 0
    %265 = vmatpush1.bf16.msra.mxu0 0
    %266 = vmatprep.subr.bf16.mxu0 0
    %267 = vmatpush1.bf16.msra.mxu0 0
    %268 = vmatprep.subr.bf16.mxu0 0
    %269 = vmatpush1.bf16.msra.mxu0 0
    %270 = vmatprep.subr.bf16.mxu0 0
    %271 = vmatpush1.bf16.msra.mxu0 0
    %272 = vmatprep.subr.bf16.mxu0 0
    %273 = vmatpush1.bf16.msra.mxu0 0
    %274 = vmatprep.subr.bf16.mxu0 0
    %275 = vmatpush1.bf16.msra.mxu0 0
    %276 = vmatprep.subr.bf16.mxu0 0
    %277 = vmatpush1.bf16.msra.mxu0 0
    %278 = vmatprep.subr.bf16.mxu0 0
    %279 = vmatpush1.bf16.msra.mxu0 0
    %280 = vmatprep.subr.bf16.mxu0 0
    %281 = vmatpush1.bf16.msra.mxu0 0
    %282 = vmatprep.subr.bf16.mxu0 0
    %283 = vmatpush1.bf16.msra.mxu0 0
    %284 = vmatprep.subr.bf16.mxu0 0
    %285 = vmatpush1.bf16.msra.mxu0 0
    %286 = vmatprep.subr.bf16.mxu0 0
    %287 = vmatpush1.bf16.msra.mxu0 0
    %288 = vmatprep.subr.bf16.mxu0 0
    %289 = vmatpush1.bf16.msra.mxu0 0
    %290 = vmatprep.subr.bf16.mxu0 0
    %291 = vmatpush1.bf16.msra.mxu0 0
    %292 = vmatprep.mubr.bf16.mxu0 0
    %293 = vmatmul.mubr.bf16.gmra.mrb[0].mxu0 %v258
    %v294 = vpop.f32.mrb[0].mxu0
    %v295 = vadd.f32 0.0, %v294
    %v296 = vpop.f32.mrb[0].mxu0
    %v297 = vpop.f32.mrb[0].mxu0
    %v298 = vpop.f32.mrb[0].mxu0
    %299 = vdwg.mxu0
    %v300 = vmax.f32 %v295, 0.0
    %v301 = vadd.f32 %v300, %v49
    %v302 = vpack.c.bf16 %v301, %v301
    %s303 = scalar_lea.vmem %s2, 64
    %v304 = vld [vmem:[%s303] sm:$0xf]
    %v305 = vld [vmem:[%s303 + $0x4] sm:$0xf]
    %v306 = vld [vmem:[%s303 + $0x8] sm:$0xf]
    %v307 = vld [vmem:[%s303 + $0xc] sm:$0xf]
    %v312 = vunpack.c.l.b16 %v304
    %v313 = vunpack.c.l.b16 %v305
    %v314 = vunpack.c.l.b16 %v306
    %v315 = vunpack.c.l.b16 %v307
    %v316 = vpack.c.b16 %v313, %v312
    %v317 = vpack.c.b16 %v315, %v314
    %v321 = vsel %vm67, %v302, 0
    %323 = vmatprep.subr.bf16.mxu0 0
    %324 = vmatpush1.bf16.msra.mxu0 %v316
    %325 = vmatprep.subr.bf16.mxu0 0
    %326 = vmatpush1.bf16.msra.mxu0 %v317
    %327 = vmatprep.subr.bf16.mxu0 0
    %328 = vmatpush1.bf16.msra.mxu0 0
    %329 = vmatprep.subr.bf16.mxu0 0
    %330 = vmatpush1.bf16.msra.mxu0 0
    %331 = vmatprep.subr.bf16.mxu0 0
    %332 = vmatpush1.bf16.msra.mxu0 0
    %333 = vmatprep.subr.bf16.mxu0 0
    %334 = vmatpush1.bf16.msra.mxu0 0
    %335 = vmatprep.subr.bf16.mxu0 0
    %336 = vmatpush1.bf16.msra.mxu0 0
    %337 = vmatprep.subr.bf16.mxu0 0
    %338 = vmatpush1.bf16.msra.mxu0 0
    %339 = vmatprep.subr.bf16.mxu0 0
    %340 = vmatpush1.bf16.msra.mxu0 0
    %341 = vmatprep.subr.bf16.mxu0 0
    %342 = vmatpush1.bf16.msra.mxu0 0
    %343 = vmatprep.subr.bf16.mxu0 0
    %344 = vmatpush1.bf16.msra.mxu0 0
    %345 = vmatprep.subr.bf16.mxu0 0
    %346 = vmatpush1.bf16.msra.mxu0 0
    %347 = vmatprep.subr.bf16.mxu0 0
    %348 = vmatpush1.bf16.msra.mxu0 0
    %349 = vmatprep.subr.bf16.mxu0 0
    %350 = vmatpush1.bf16.msra.mxu0 0
    %351 = vmatprep.subr.bf16.mxu0 0
    %352 = vmatpush1.bf16.msra.mxu0 0
    %353 = vmatprep.subr.bf16.mxu0 0
    %354 = vmatpush1.bf16.msra.mxu0 0
    %355 = vmatprep.mubr.bf16.mxu0 0
    %356 = vmatmul.mubr.bf16.gmra.mrb[0].mxu0 %v321
    %v357 = vpop.f32.mrb[0].mxu0
    %v358 = vadd.f32 0.0, %v357
    %v359 = vpop.f32.mrb[0].mxu0
    %v360 = vpop.f32.mrb[0].mxu0
    %v361 = vpop.f32.mrb[0].mxu0
    %362 = vdwg.mxu0
    %vm363 = vcmp.eq.s32.totalorder %v32, 0
    %vm364 = vmand %vm35, %vm363
    %v365 = vsel %vm364, %v358, -inf
    %366 = vmax.xlane.f32.xlu0 %v365
    %v367 = vpop.xlane.xlu0 %366
    %v368 = vrot.slane %v367, 4
    %v369 = vmax.f32 %v367, %v368
    %v370 = vrot.slane %v369, 2
    %v371 = vmax.f32 %v369, %v370
    %v372 = vrot.slane %v371, 1
    %v373 = vmax.f32 %v371, %v372
    %s374 = vtos %v373
    %v375 = vstv %s374
    %vm376 = vcmp.eq.f32.partialorder %v365, %v375
    %vm377 = vmand %vm364, %vm376
    %v378 = vsel %vm377, %v30, 4
    %v379 = vand.u32 %v378, 65535
    %v380 = vshra.s32 %v378, 16
    %v381 = vcvt.s32.f32 %v379
    %v382 = vcvt.s32.f32 %v380
    %383 = vmin.xlane.f32.xlu0 %v382
    %v384 = vpop.xlane.xlu0 %383
    %vm385 = vcmp.eq.f32.partialorder %v382, %v384
    %v386 = vsel %vm385, %v381, inf
    %387 = vmin.xlane.f32.xlu0 %v386
    %v388 = vpop.xlane.xlu0 %387
    %v389 = vcvt.f32.s32 %v388
    %v390 = vcvt.f32.s32 %v384
    %v391 = vshll.u32 %v390, 16
    %v392 = vadd.s32 %v391, %v389
    %v393 = vrot.slane %v392, 4
    %vm394 = vcmp.lt.s32.totalorder %v392, %v393
    %v395 = vsel %vm394, %v392, %v393
    %v396 = vrot.slane %v395, 2
    %vm397 = vcmp.lt.s32.totalorder %v395, %v396
    %v398 = vsel %vm397, %v395, %v396
    %v399 = vrot.slane %v398, 1
    %vm400 = vcmp.lt.s32.totalorder %v398, %v399
    %v401 = vsel %vm400, %v398, %v399
    %s402 = vtos %v401
    %s403 = sld [smem:[#allocation2]]
    %s404 = sld [smem:[#allocation2 + $0x1]]
    %p405 = scmp.ne.s32.totalorder %s403, 0
    %s406 = scalar_select %p405, %s404, %s402
    %s407 = scalar_lea.smem [#allocation5], 0
    %408 = sst [smem:[%s407]] %s406
    // Predicated region
    $region18: #{policy_forward.1} parent=1 // pred_check
      _
    $region19: #{policy_forward.1} parent=1 // pred_check_branch
      %410 = sbr.rel (0) target = $region21
    $region20: #{policy_forward.1} parent=1 // pred_region
      %s412 = ssub.s32 16, 16
      %413 = vsyncadd [#allocation3], %s412
      %416 = dma.smem_to_hbm [#allocation5], 16, %s3, [#allocation3]
    $region21: #{policy_forward.1} parent=1 // pred_fallthru
      _
    // Predicated region
    $region22: #{policy_forward.1} parent=1 // pred_check
      _
    $region23: #{policy_forward.1} parent=1 // pred_check_branch
      %418 = sbr.rel (0) target = $region25
    $region24: #{policy_forward.1} parent=1 // pred_region
      %419 = dma.done [#allocation3], 16
    $region25: #{policy_forward.1} parent=1 // pred_fallthru
      _
    %420 = sfence
    %421 = vsyncpa [#allocation3], 1
    %422 = vsyncpa [#allocation4], 1

</llo_original>
